<compile_context>
chip_gen: v6e
topology: v6e:2x2x1
jax: 0.10.0
libtpu: 0.0.40
codegen_flags: <defaults>
</compile_context>

<pallas_src>
import functools

import jax
import jax.numpy as jnp
from jax.experimental import pallas as pl
from jax.experimental.pallas import tpu as pltpu


def _round_up(v: int, m: int) -> int:
    return ((v + m - 1) // m) * m


def _choose_batch_tile(B: int, H: int, K_pad: int, budget_bytes: int = 8 << 20) -> int:
    """Pick a batch tile that keeps the double-buffered x/out streams under budget.

    Conservative budget (8 MiB) fits the 16 MiB scoped default on v5e and the
    32 MiB scoped default on v6e/v7x (v7x physical VMEM is only 64 MiB).
    """
    tb = min(512, _round_up(B, 8))
    per_row = 2 * 4 * (H + K_pad)  # 2x buffered f32 x-block + f32 out-block per row
    while tb > 8 and tb * per_row > budget_bytes:
        tb //= 2
    return max(8, (tb // 8) * 8)


def _clustering_kernel(x_ref, c_ref, csq_ref, out_ref, *,
                       inv_alpha: float, power: float, n_valid_k: int):
    x = x_ref[...].astype(jnp.float32)      # (TB, H)
    c = c_ref[...].astype(jnp.float32)      # (K_pad, H)  (pad rows are zero)
    c_sq = csq_ref[...]                     # (1, K_pad)  precomputed ||c||^2

    # Pairwise squared distances: ||x||^2 + ||c||^2 - 2 x.c
    # dot_general contracts the last axes directly -> no transpose feeding the MXU.
    x_sq = jnp.sum(x * x, axis=1, keepdims=True)                       # (TB, 1)
    xc = jax.lax.dot_general(x, c, (((1,), (1,)), ((), ())),
                             preferred_element_type=jnp.float32)       # (TB, K_pad)
    norm_sq = jnp.maximum(x_sq + c_sq - 2.0 * xc, 0.0)                 # clamp cancellation

    # Student-t numerator; 1/alpha folded in as a static multiply.
    numerator = pl.reciprocal(1.0 + norm_sq * inv_alpha, approx=False)
    if power != 1.0:  # trace-time constant; alpha=1.0 (DEC default) skips this
        numerator = jnp.exp(power * jnp.log(numerator))

    # Mask the K-padding columns out of the row sum (centers padded with zeros
    # would otherwise contribute 1/(1+||x||^2/alpha)).
    tb, kp = numerator.shape
    if n_valid_k != kp:
        col = jax.lax.broadcasted_iota(jnp.int32, (tb, kp), 1)
        numerator = jnp.where(col < n_valid_k, numerator, 0.0)

    denom = jnp.sum(numerator, axis=1, keepdims=True)                  # (TB, 1)
    # approx=False keeps the 1e-5 row-sum tolerance; flip to approx=True if relaxed.
    t_dist = numerator * pl.reciprocal(denom, approx=False)
    out_ref[...] = t_dist.astype(out_ref.dtype)


def clustering_layer(x, cluster_centers, alpha: float = 1.0):
    """Soft cluster assignments (Student-t kernel) computed in a Pallas TPU kernel.

    x:               (B, H) float32
    cluster_centers: (K, H) float32
    returns:         (B, K) float32, rows sum to 1
    """
    B, H = x.shape
    K, Hc = cluster_centers.shape
    assert H == Hc, "hidden dim mismatch"

    # Lane-dense output: pad K to a multiple of 128.
    K_pad = _round_up(K, 128)
    # Batch tiling.
    TB = _choose_batch_tile(B, H, K_pad)
    B_pad = _round_up(B, TB)

    x_p = x if B_pad == B else jnp.pad(x, ((0, B_pad - B), (0, 0)))
    c_p = (cluster_centers if K_pad == K
           else jnp.pad(cluster_centers, ((0, K_pad - K), (0, 0))))
    c_p = c_p.astype(jnp.float32)
    # ||c||^2 computed once, outside the batch loop.  (1, K_pad)
    c_sq = jnp.sum(c_p * c_p, axis=1, keepdims=True).T

    power = float(alpha + 1.0) / 2.0
    kernel = functools.partial(_clustering_kernel,
                               inv_alpha=1.0 / float(alpha),
                               power=power,
                               n_valid_k=K)

    cost = pl.CostEstimate(
        flops=2 * B_pad * K_pad * H + 6 * B_pad * K_pad,
        transcendentals=(2 * B_pad * K_pad) if power != 1.0 else 0,
        bytes_accessed=4 * (B_pad * H + K_pad * H + K_pad + B_pad * K_pad),
    )

    out = pl.pallas_call(
        kernel,
        out_shape=jax.ShapeDtypeStruct((B_pad, K_pad), jnp.float32),
        grid_spec=pltpu.PrefetchScalarGridSpec(
            num_scalar_prefetch=0,
            grid=(B_pad // TB,),
            in_specs=[
                pl.BlockSpec((TB, H), lambda i: (i, 0)),        # x: tiled over batch
                pl.BlockSpec((K_pad, H), lambda i: (0, 0)),     # centers: resident
                pl.BlockSpec((1, K_pad), lambda i: (0, 0)),     # ||c||^2: resident
            ],
            out_specs=pl.BlockSpec((TB, K_pad), lambda i: (i, 0)),
        ),
        compiler_params=pltpu.CompilerParams(
            dimension_semantics=("parallel",),   # megacore split over batch tiles
            vmem_limit_bytes=32 * 1024 * 1024,
        ),
        cost_estimate=cost,
    )(x_p, c_p, c_sq)

    return out[:B, :K]


def _xavier_uniform(key, shape, dtype=jnp.float32):
    # torch.nn.init.xavier_uniform_ on a 2-D tensor (fan_out, fan_in) = shape
    fan_out, fan_in = shape
    bound = (6.0 / (fan_in + fan_out)) ** 0.5
    return jax.random.uniform(key, shape, dtype=dtype, minval=-bound, maxval=bound)


def _reference(x, centers, alpha=1.0):
    # Pure-JAX reference mirroring the PyTorch forward exactly.
    diff = x[:, None, :] - centers[None, :, :]
    norm_sq = jnp.sum(diff * diff, axis=2)
    num = 1.0 / (1.0 + norm_sq / alpha)
    num = num ** (float(alpha + 1.0) / 2.0)
    return num / jnp.sum(num, axis=1, keepdims=True)


if __name__ == "__main__":
    n_clusters = 10
    hidden = 16
    batch = 8

    key = jax.random.PRNGKey(0)
    k_x, k_c = jax.random.split(key)

    x = jax.random.normal(k_x, (batch, hidden), dtype=jnp.float32)
    cluster_centers = _xavier_uniform(k_c, (n_clusters, hidden))

    # alpha = 1.0 (DEC default, pow skipped) and alpha = 2.0 (EUP exp/log path).
    for alpha in (1.0, 2.0):
        t_dist = clustering_layer(x, cluster_centers, alpha=alpha)
        t_dist = jax.block_until_ready(t_dist)

        ref = _reference(x, cluster_centers, alpha=alpha)
        assert t_dist.shape == (batch, n_clusters)
        assert jnp.allclose(t_dist, ref, atol=1e-5, rtol=1e-5), \
            f"mismatch vs reference (alpha={alpha})"
        assert jnp.allclose(jnp.sum(t_dist, axis=1), 1.0, atol=1e-5), \
            f"rows must sum to 1 (alpha={alpha})"

    print("KERNEL_OK")
</pallas_src>

<mosaic_0001>
module attributes {stable_mosaic.version = 11 : i64} {
  func.func @_clustering_kernel(%arg0: i32, %arg1: memref<8x16xf32, #tpu.memory_space<vmem>>, %arg2: memref<128x16xf32, #tpu.memory_space<vmem>>, %arg3: memref<1x128xf32, #tpu.memory_space<vmem>>, %arg4: memref<8x128xf32, #tpu.memory_space<vmem>>) attributes {dimension_semantics = [#tpu.dimension_semantics<parallel>], iteration_bounds = array<i64: 1>, scalar_prefetch = 0 : i64, scratch_operands = 0 : i64, tpu.core_type = #tpu.core_type<tc>, window_params = [{transform_indices = @transform_0, window_bounds = array<i64: 8, 16>}, {pipeline_mode = #tpu.pipeline_mode<synchronous>, transform_indices = @transform_1, window_bounds = array<i64: 128, 16>}, {pipeline_mode = #tpu.pipeline_mode<synchronous>, transform_indices = @transform_2, window_bounds = array<i64: 1, 128>}, {transform_indices = @transform_3, window_bounds = array<i64: 8, 128>}]} {
    %c0 = arith.constant 0 : index
    %c0_0 = arith.constant 0 : index
    %0 = vector.load %arg1[%c0, %c0_0] : memref<8x16xf32, #tpu.memory_space<vmem>>, vector<8x16xf32>
    %c0_1 = arith.constant 0 : index
    %c0_2 = arith.constant 0 : index
    %1 = vector.load %arg2[%c0_1, %c0_2] : memref<128x16xf32, #tpu.memory_space<vmem>>, vector<128x16xf32>
    %c0_3 = arith.constant 0 : index
    %c0_4 = arith.constant 0 : index
    %2 = vector.load %arg3[%c0_3, %c0_4] : memref<1x128xf32, #tpu.memory_space<vmem>>, vector<1x128xf32>
    %3 = arith.mulf %0, %0 : vector<8x16xf32>
    %cst = arith.constant dense<0.000000e+00> : vector<8xf32>
    %4 = vector.multi_reduction <add>, %3, %cst [1] : vector<8x16xf32> to vector<8xf32>
    %5 = vector.shape_cast %4 : vector<8xf32> to vector<8x1xf32>
    %cst_5 = arith.constant dense<0.000000e+00> : vector<8x128xf32>
    %6 = tpu.matmul %0, %1, %cst_5 {dimension_numbers = #tpu.dot_dimension_numbers<[1], [1], [0], [0], [0, 0, 1, 0], [], []>} : vector<8x16xf32>, vector<128x16xf32>, vector<8x128xf32> -> vector<8x128xf32>
    %7 = vector.broadcast %5 : vector<8x1xf32> to vector<8x128xf32>
    %8 = vector.broadcast %2 : vector<1x128xf32> to vector<8x128xf32>
    %9 = arith.addf %7, %8 : vector<8x128xf32>
    %cst_6 = arith.constant 2.000000e+00 : f32
    %10 = vector.broadcast %cst_6 : f32 to vector<8x128xf32>
    %11 = arith.mulf %10, %6 : vector<8x128xf32>
    %12 = arith.subf %9, %11 : vector<8x128xf32>
    %cst_7 = arith.constant 0.000000e+00 : f32
    %13 = vector.broadcast %cst_7 : f32 to vector<8x128xf32>
    %14 = arith.maximumf %12, %13 : vector<8x128xf32>
    %cst_8 = arith.constant 1.000000e+00 : f32
    %15 = vector.broadcast %cst_8 : f32 to vector<8x128xf32>
    %16 = arith.mulf %14, %15 : vector<8x128xf32>
    %cst_9 = arith.constant 1.000000e+00 : f32
    %17 = vector.broadcast %cst_9 : f32 to vector<8x128xf32>
    %18 = arith.addf %17, %16 : vector<8x128xf32>
    %19 = tpu.reciprocal %18 : vector<8x128xf32> -> vector<8x128xf32>
    %20 = tpu.iota {dimensions = array<i32: 1>} : vector<8x128xi32>
    %c10_i32 = arith.constant 10 : i32
    %21 = vector.broadcast %c10_i32 : i32 to vector<8x128xi32>
    %22 = arith.cmpi slt, %20, %21 : vector<8x128xi32>
    %cst_10 = arith.constant 0.000000e+00 : f32
    %23 = vector.broadcast %cst_10 : f32 to vector<8x128xf32>
    %24 = arith.select %22, %19, %23 : vector<8x128xi1>, vector<8x128xf32>
    %cst_11 = arith.constant dense<0.000000e+00> : vector<8xf32>
    %25 = vector.multi_reduction <add>, %24, %cst_11 [1] : vector<8x128xf32> to vector<8xf32>
    %26 = vector.shape_cast %25 : vector<8xf32> to vector<8x1xf32>
    %27 = tpu.reciprocal %26 : vector<8x1xf32> -> vector<8x1xf32>
    %28 = vector.broadcast %27 : vector<8x1xf32> to vector<8x128xf32>
    %29 = arith.mulf %24, %28 : vector<8x128xf32>
    %c0_12 = arith.constant 0 : index
    %c0_13 = arith.constant 0 : index
    %30 = vector.load %arg4[%c0_12, %c0_13] : memref<8x128xf32, #tpu.memory_space<vmem>>, vector<8x128xf32>
    tpu.vector_store %arg4[%c0_12, %c0_13], %29 {strides = array<i32>} : memref<8x128xf32, #tpu.memory_space<vmem>>, vector<8x128xf32>,
    return
  }
  func.func @transform_0(%arg0: i32) -> (i32, i32) {
    %c0_i32 = arith.constant 0 : i32
    %c0_i32_0 = arith.constant 0 : i32
    return %arg0, %c0_i32 : i32, i32
  }
  func.func @transform_1(%arg0: i32) -> (i32, i32) {
    %c0_i32 = arith.constant 0 : i32
    %c0_i32_0 = arith.constant 0 : i32
    %c0_i32_1 = arith.constant 0 : i32
    return %c0_i32, %c0_i32_0 : i32, i32
  }
  func.func @transform_2(%arg0: i32) -> (i32, i32) {
    %c0_i32 = arith.constant 0 : i32
    %c0_i32_0 = arith.constant 0 : i32
    %c0_i32_1 = arith.constant 0 : i32
    return %c0_i32, %c0_i32_0 : i32, i32
  }
  func.func @transform_3(%arg0: i32) -> (i32, i32) {
    %c0_i32 = arith.constant 0 : i32
    %c0_i32_0 = arith.constant 0 : i32
    return %arg0, %c0_i32 : i32, i32
  }
}

</mosaic_0001>

<llo_original>
// kernel: tpu_custom_call.1
$region0: #{tpu_custom_call.1}
  #allocation0 [shape = 'u32[]', space=smem, size = 0x4, offset = 0x4, fixed_abs, tag = 'smem constant byte address 0x4 - core index']
  #allocation1 [shape = 'u32[144,128]{1,0:T(1,128)}', space=vmem, size = 0x12000, scoped, tag = 'internal scratch']
  %s0 = inlined_call_operand.vmem [shape: f32[8,16], index: 0, kind: input, shape index: {}]
  %s1 = inlined_call_operand.vmem [shape: f32[128,16], index: 1, kind: input, shape index: {}]
  %s2 = inlined_call_operand.vmem [shape: f32[1,128], index: 2, kind: input, shape index: {}]
  %s3 = inlined_call_operand.hbm [shape: f32[8,128], index: 3, kind: output, shape index: {}]
  %s4 = sld [smem:[#allocation0]]
  $region22: #{tpu_custom_call.1} parent=0
    _
  %s6 = ssub.s32 1, %s4
  %s7 = scalar_select 0, %s6, %s4
  $region1: #{tpu_custom_call.1} parent=0
    #allocation2 [shape = 'u8[4096]{0}', space=vmem, size = 0x1000, scoped, tag = 'output window, operand 0, single buffered']
    #allocation3 [shape = 's32[1]{0}', space=sflag, size = 0x4, scoped, tag = 'scoped memory for tpu_custom_call.1']
    %8 = vsyncpa [#allocation3], 0
    // Predicated region
    $region2: #{tpu_custom_call.1} parent=1 // pred_check
      _
    $region3: #{tpu_custom_call.1} parent=1 // pred_check_branch
      %10 = sbr.rel (0) target = $region5
    $region4: #{tpu_custom_call.1} parent=1 // pred_region
      _
    $region5: #{tpu_custom_call.1} parent=1 // pred_fallthru
      _
    // Predicated region
    $region6: #{tpu_custom_call.1} parent=1 // pred_check
      _
    $region7: #{tpu_custom_call.1} parent=1 // pred_check_branch
      %12 = sbr.rel (0) target = $region9
    $region8: #{tpu_custom_call.1} parent=1 // pred_region
      _
    $region9: #{tpu_custom_call.1} parent=1 // pred_fallthru
      _
    // Predicated region
    $region10: #{tpu_custom_call.1} parent=1 // pred_check
      _
    $region11: #{tpu_custom_call.1} parent=1 // pred_check_branch
      %14 = sbr.rel (0) target = $region13
    $region12: #{tpu_custom_call.1} parent=1 // pred_region
      _
    $region13: #{tpu_custom_call.1} parent=1 // pred_fallthru
      _
    %v15 = vld [vmem:[%s0] sm:$0xff]
    %v16 = vld [vmem:[%s1] sm:$0xff]
    %v17 = vld [vmem:[%s1 + $0x8] sm:$0xff]
    %v18 = vld [vmem:[%s1 + $0x10] sm:$0xff]
    %v19 = vld [vmem:[%s1 + $0x18] sm:$0xff]
    %v20 = vld [vmem:[%s1 + $0x20] sm:$0xff]
    %v21 = vld [vmem:[%s1 + $0x28] sm:$0xff]
    %v22 = vld [vmem:[%s1 + $0x30] sm:$0xff]
    %v23 = vld [vmem:[%s1 + $0x38] sm:$0xff]
    %v24 = vld [vmem:[%s1 + $0x40] sm:$0xff]
    %v25 = vld [vmem:[%s1 + $0x48] sm:$0xff]
    %v26 = vld [vmem:[%s1 + $0x50] sm:$0xff]
    %v27 = vld [vmem:[%s1 + $0x58] sm:$0xff]
    %v28 = vld [vmem:[%s1 + $0x60] sm:$0xff]
    %v29 = vld [vmem:[%s1 + $0x68] sm:$0xff]
    %v30 = vld [vmem:[%s1 + $0x70] sm:$0xff]
    %v31 = vld [vmem:[%s1 + $0x78] sm:$0xff]
    %v32 = vld [vmem:[%s2] sm:$0x1]
    %v33 = vmul.f32 %v15, %v15
    %vm34 = vcmask 130048
    %v35 = vsel %vm34, %v33, 0.0
    %36 = vadd.xlane.f32.xlu0 %v35
    %v37 = vpop.xlane.xlu0 %36
    %v39 = vsel %vm34, %v15, 0
    %v42 = vsel %vm34, %v16, 0
    %v45 = vsel %vm34, %v17, 0
    %v48 = vsel %vm34, %v18, 0
    %v51 = vsel %vm34, %v19, 0
    %v54 = vsel %vm34, %v20, 0
    %v57 = vsel %vm34, %v21, 0
    %v60 = vsel %vm34, %v22, 0
    %v63 = vsel %vm34, %v23, 0
    %v66 = vsel %vm34, %v24, 0
    %v69 = vsel %vm34, %v25, 0
    %v72 = vsel %vm34, %v26, 0
    %v75 = vsel %vm34, %v27, 0
    %v78 = vsel %vm34, %v28, 0
    %v81 = vsel %vm34, %v29, 0
    %v84 = vsel %vm34, %v30, 0
    %v87 = vsel %vm34, %v31, 0
    %89 = vmatprep.subr.mxu0 0.0
    %90 = vmatpush1.xpose.msra.mxu0 %v87
    %91 = vmatprep.subr.mxu0 0.0
    %92 = vmatpush1.xpose.msra.mxu0 %v84
    %93 = vmatprep.subr.mxu0 0.0
    %94 = vmatpush1.xpose.msra.mxu0 %v81
    %95 = vmatprep.subr.mxu0 0.0
    %96 = vmatpush1.xpose.msra.mxu0 %v78
    %97 = vmatprep.subr.mxu0 0.0
    %98 = vmatpush1.xpose.msra.mxu0 %v75
    %99 = vmatprep.subr.mxu0 0.0
    %100 = vmatpush1.xpose.msra.mxu0 %v72
    %101 = vmatprep.subr.mxu0 0.0
    %102 = vmatpush1.xpose.msra.mxu0 %v69
    %103 = vmatprep.subr.mxu0 0.0
    %104 = vmatpush1.xpose.msra.mxu0 %v66
    %105 = vmatprep.subr.mxu0 0.0
    %106 = vmatpush1.xpose.msra.mxu0 %v63
    %107 = vmatprep.subr.mxu0 0.0
    %108 = vmatpush1.xpose.msra.mxu0 %v60
    %109 = vmatprep.subr.mxu0 0.0
    %110 = vmatpush1.xpose.msra.mxu0 %v57
    %111 = vmatprep.subr.mxu0 0.0
    %112 = vmatpush1.xpose.msra.mxu0 %v54
    %113 = vmatprep.subr.mxu0 0.0
    %114 = vmatpush1.xpose.msra.mxu0 %v51
    %115 = vmatprep.subr.mxu0 0.0
    %116 = vmatpush1.xpose.msra.mxu0 %v48
    %117 = vmatprep.subr.mxu0 0.0
    %118 = vmatpush1.xpose.msra.mxu0 %v45
    %119 = vmatprep.subr.mxu0 0.0
    %120 = vmatpush1.xpose.msra.mxu0 %v42
    %121 = vmatprep.subr.mxu0 0.0
    %122 = vmatpush2.xpose.msra.mxu0 0.0
    %123 = vmatprep.subr.mxu0 0.0
    %124 = vmatpush2.xpose.msra.mxu0 0.0
    %125 = vmatprep.subr.mxu0 0.0
    %126 = vmatpush2.xpose.msra.mxu0 0.0
    %127 = vmatprep.subr.mxu0 0.0
    %128 = vmatpush2.xpose.msra.mxu0 0.0
    %129 = vmatprep.subr.mxu0 0.0
    %130 = vmatpush2.xpose.msra.mxu0 0.0
    %131 = vmatprep.subr.mxu0 0.0
    %132 = vmatpush2.xpose.msra.mxu0 0.0
    %133 = vmatprep.subr.mxu0 0.0
    %134 = vmatpush2.xpose.msra.mxu0 0.0
    %135 = vmatprep.subr.mxu0 0.0
    %136 = vmatpush2.xpose.msra.mxu0 0.0
    %137 = vmatprep.subr.mxu0 0.0
    %138 = vmatpush2.xpose.msra.mxu0 0.0
    %139 = vmatprep.subr.mxu0 0.0
    %140 = vmatpush2.xpose.msra.mxu0 0.0
    %141 = vmatprep.subr.mxu0 0.0
    %142 = vmatpush2.xpose.msra.mxu0 0.0
    %143 = vmatprep.subr.mxu0 0.0
    %144 = vmatpush2.xpose.msra.mxu0 0.0
    %145 = vmatprep.subr.mxu0 0.0
    %146 = vmatpush2.xpose.msra.mxu0 0.0
    %147 = vmatprep.subr.mxu0 0.0
    %148 = vmatpush2.xpose.msra.mxu0 0.0
    %149 = vmatprep.subr.mxu0 0.0
    %150 = vmatpush2.xpose.msra.mxu0 0.0
    %151 = vmatprep.subr.mxu0 0.0
    %152 = vmatpush2.xpose.msra.mxu0 0.0
    %153 = vmatprep.mubr.f32.mxu0 0.0
    %154 = vmatmul.mubr.f32.gmra.mxu0 %v39
    %v155 = vpop.f32.mrf.mxu0
    %v156 = vadd.f32 0.0, %v155
    %v157 = vpop.f32.mrf.mxu0
    %158 = vdwg.mxu0
    %v160 = vlaneseq
    %v161 = vshrl.u32 %v160, 7
    %v162 = vsub.s32 0, %v161
    %v163 = vrot.slane %v32, %v162
    %v165 = vadd.f32 %v37, %v163
    %v166 = vmul.f32 %v156, 2.0
    %v167 = vsub.f32 %v165, %v166
    %v168 = vmax.f32 %v167, 0.0
    %v169 = vadd.f32 %v168, 1.0
    %v170 = vrcp.pop %v169
    %v171 = vlaneseq
    %v172 = vand.u32 %v171, 127
    %vm173 = vcmp.lt.s32.totalorder %v172, 10
    %v174 = vsel %vm173, %v170, 0.0
    %175 = vadd.xlane.f32.xlu0 %v174
    %v176 = vpop.xlane.xlu0 %175
    %v177 = vrcp.pop %v176
    %v178 = vmul.f32 %v174, %v177
    %179 = vst [vmem:[#allocation2] sm:$0xff] %v178
    // Predicated region
    $region14: #{tpu_custom_call.1} parent=1 // pred_check
      _
    $region15: #{tpu_custom_call.1} parent=1 // pred_check_branch
      %181 = sbr.rel (0) target = $region17
    $region16: #{tpu_custom_call.1} parent=1 // pred_region
      %s183 = ssub.s32 128, 128
      %184 = vsyncadd [#allocation3], %s183
      %s186 = sshll.u32 [#allocation2], 4
      %s187 = int_to_ptr.vmem [resolvable:$true] %s186
      %189 = dma.vmem_to_hbm [thread:$0]  %s187, 128, %s3, [#allocation3]
    $region17: #{tpu_custom_call.1} parent=1 // pred_fallthru
      _
    // Predicated region
    $region18: #{tpu_custom_call.1} parent=1 // pred_check
      _
    $region19: #{tpu_custom_call.1} parent=1 // pred_check_branch
      %191 = sbr.rel (0) target = $region21
    $region20: #{tpu_custom_call.1} parent=1 // pred_region
      %192 = dma.done [#allocation3], 128
    $region21: #{tpu_custom_call.1} parent=1 // pred_fallthru
      _
    %193 = vsyncpa [#allocation3], 1

</llo_original>
